<compile_context>
chip_gen: v6e
topology: v6e:2x2x1
jax: 0.10.0
libtpu: 0.0.40
codegen_flags: <defaults>
</compile_context>

<pallas_src>
import functools

import jax
import jax.numpy as jnp
from jax.experimental import pallas as pl
from jax.experimental.pallas import tpu as pltpu

LANE = 128


def _round_up(x, m):
    return ((x + m - 1) // m) * m


def qmix_kernel(q_ref, s_ref, w_ref, bias_ref, vrow_ref, b2b1_ref, out_ref,
                *, n_agents, lane):
    q = q_ref[...].astype(jnp.float32)            # (tm, A)   elementwise math in f32
    s = s_ref[...]                                # (tm, S)   f32 or bf16

    # One fused hyper-network projection on the MXU:
    #   columns [a*lane, a*lane+H)   -> hyper_w1, agent a (zero-padded to 128 lanes)
    #   columns [A*lane ...)         -> hyper_b1, hyper_w2, hyper_b2[0] (one lane
    #                                   group each, zero-padded)
    z = jnp.dot(s, w_ref[...], preferred_element_type=jnp.float32) + bias_ref[...]

    off = n_agents * lane
    b1 = z[:, off:off + lane]                                      # (tm, lane)
    w2 = jnp.abs(z[:, off + lane:off + 2 * lane])                  # (tm, lane)
    hb2 = jnp.maximum(z[:, off + 2 * lane:off + 3 * lane], 0.0)    # (tm, lane)

    # bmm(q_values(.,1,A), w1(.,A,H)): rank-1 accumulation over the tiny, static
    # agent axis.  Every w1 slice is a whole 128-lane vreg group (lane aligned),
    # so the only cross-lane work is the A per-agent broadcasts of q.
    h = b1
    for a in range(n_agents):
        h = h + q[:, a:a + 1] * jnp.abs(z[:, a * lane:(a + 1) * lane])

    # ELU(alpha=1).  Negative branch uses the cancellation-free identity
    # expm1(x) = tanh(x/2) * (exp(x) + 1), built from EUP-supported exp/tanh.
    neg = jnp.minimum(h, 0.0)
    hidden = jnp.where(h > 0, h, jnp.tanh(0.5 * neg) * (jnp.exp(neg) + 1.0))

    # q_total = bmm(hidden, w2) + (relu(hyper_b2[0](s)) @ hyper_b2[1].W + bias).
    # Both (tm,H)x(H,1) contractions fused into one VPU multiply + one lane reduce;
    # zero-padded lanes contribute exactly zero.
    red = jnp.sum(hidden * w2 + hb2 * vrow_ref[...], axis=-1, keepdims=True)
    out_ref[...] = (red + b2b1_ref[0, 0]).astype(out_ref.dtype)


def fuse_hyper_params(params, *, state_shape, n_agents, hidden_dim, compute_dtype):
    """Pack the four state-conditioned hyper-net layers into one lane-aligned
    (S, (A+3)*lane) weight + (1, (A+3)*lane) bias, plus the final hyper_b2[1]
    row (1, lane) and its scalar bias."""
    (w1w, w1b, b1w, b1b, w2w, w2b, b2w0, b2b0, b2w1, b2b1) = params
    A, H, S = n_agents, hidden_dim, state_shape
    lane = _round_up(H, LANE)
    C = (A + 3) * lane

    W = jnp.zeros((S, C), jnp.float32)
    bias = jnp.zeros((1, C), jnp.float32)
    for a in range(A):                       # hyper_w1: one 128-lane group per agent
        W = W.at[:, a * lane:a * lane + H].set(w1w[:, a * H:(a + 1) * H])
        bias = bias.at[:, a * lane:a * lane + H].set(w1b[:, a * H:(a + 1) * H])
    off = A * lane
    for wt, bt in ((b1w, b1b), (w2w, w2b), (b2w0, b2b0)):
        W = W.at[:, off:off + H].set(wt)
        bias = bias.at[:, off:off + H].set(bt)
        off += lane

    vrow = jnp.zeros((1, lane), jnp.float32).at[:, :H].set(b2w1.reshape(1, H))
    b2b1 = b2b1.reshape(1, 1).astype(jnp.float32)
    return W.astype(compute_dtype), bias, vrow, b2b1, lane


def qmix_forward(q_values, states, params, *, n_agents, hidden_dim,
                 tm=512, compute_dtype=jnp.float32):
    """q_values: (bs, T, n_agents), states: (bs, T, state_shape) -> (bs, T, 1)."""
    bs, T, A = q_values.shape
    S = states.shape[-1]
    N = bs * T

    W, bias, vrow, b2b1, lane = fuse_hyper_params(
        params, state_shape=S, n_agents=n_agents, hidden_dim=hidden_dim,
        compute_dtype=compute_dtype)

    # Large row tiles amortize per-grid-step overhead; clamp for small N and
    # zero-pad the ragged tail (sliced off after the call).  For v7x, prefer a tm
    # that keeps >= 2 grid steps so both TensorCores get work.
    tm_eff = min(_round_up(tm, 8), _round_up(N, 8))
    n_pad = _round_up(N, tm_eff)

    q2 = q_values.reshape(N, A).astype(compute_dtype)
    s2 = states.reshape(N, S).astype(compute_dtype)
    if n_pad != N:
        q2 = jnp.pad(q2, ((0, n_pad - N), (0, 0)))
        s2 = jnp.pad(s2, ((0, n_pad - N), (0, 0)))

    kernel = functools.partial(qmix_kernel, n_agents=n_agents, lane=lane)
    resident = lambda arr: pl.BlockSpec(arr.shape, lambda i: (0, 0))

    out = pl.pallas_call(
        kernel,
        out_shape=jax.ShapeDtypeStruct((n_pad, 1), jnp.float32),
        grid_spec=pltpu.PrefetchScalarGridSpec(
            num_scalar_prefetch=0,
            grid=(n_pad // tm_eff,),
            in_specs=[
                pl.BlockSpec((tm_eff, A), lambda i: (i, 0)),        # q_values rows
                pl.BlockSpec((tm_eff, S), lambda i: (i, 0)),        # state rows
                resident(W), resident(bias), resident(vrow),        # fused hyper-net
                pl.BlockSpec(memory_space=pltpu.MemorySpace.SMEM),  # b2 scalar bias
            ],
            out_specs=pl.BlockSpec((tm_eff, 1), lambda i: (i, 0)),
        ),
        compiler_params=pltpu.CompilerParams(
            dimension_semantics=("parallel",),
        ),
    )(q2, s2, W, bias, vrow, b2b1)

    return out[:N].reshape(bs, T, 1)


def make_params(key, state_shape, n_agents, hidden_dim):
    """Deterministic synthetic parameters. Weights stored as (in, out); biases (1, out)."""
    ks = jax.random.split(key, 10)
    def w(k, i, o):
        return (jax.random.normal(k, (i, o), jnp.float32) / jnp.sqrt(i)).astype(jnp.float32)
    def b(k, o):
        return jax.random.normal(k, (1, o), jnp.float32) * 0.1
    return (
        w(ks[0], state_shape, n_agents * hidden_dim), b(ks[1], n_agents * hidden_dim),  # hyper_w1
        w(ks[2], state_shape, hidden_dim),            b(ks[3], hidden_dim),             # hyper_b1
        w(ks[4], state_shape, hidden_dim),            b(ks[5], hidden_dim),             # hyper_w2
        w(ks[6], state_shape, hidden_dim),            b(ks[7], hidden_dim),             # hyper_b2[0]
        w(ks[8], hidden_dim, 1),                      b(ks[9], 1),                      # hyper_b2[2]
    )


def qmix_reference(q_values, states, params, *, n_agents, hidden_dim):
    """Pure-JAX reference mirroring the PyTorch forward exactly."""
    bs, T, A = q_values.shape
    S = states.shape[-1]
    (w1w, w1b, b1w, b1b, w2w, w2b, b2w0, b2b0, b2w1, b2b1) = params
    q = q_values.reshape(-1, 1, A)
    s = states.reshape(-1, S)
    w1 = jnp.abs(s @ w1w + w1b).reshape(-1, A, hidden_dim)
    b1 = (s @ b1w + b1b).reshape(-1, 1, hidden_dim)
    hid = jax.nn.elu(jnp.einsum('nia,nah->nih', q, w1) + b1)
    w2 = jnp.abs(s @ w2w + w2b).reshape(-1, hidden_dim, 1)
    b2 = (jnp.maximum(s @ b2w0 + b2b0, 0.0) @ b2w1 + b2b1).reshape(-1, 1, 1)
    q_tot = jnp.einsum('nih,nho->nio', hid, w2) + b2
    return q_tot.reshape(bs, -1, 1)


if __name__ == "__main__":
    N_AGENTS = 4
    QMIX_HIDDEN = 32
    STATE_SHAPE = 48

    key = jax.random.PRNGKey(0)
    k_q, k_s, k_p, k_q2, k_s2 = jax.random.split(key, 5)
    params = make_params(k_p, STATE_SHAPE, N_AGENTS, QMIX_HIDDEN)

    # Small case: bs=2, episode_limit=8 (single grid step, tm clamped to 16 rows).
    q_small = jax.random.normal(k_q, (2, 8, N_AGENTS), jnp.float32)
    s_small = jax.random.normal(k_s, (2, 8, STATE_SHAPE), jnp.float32)
    out_small = jax.block_until_ready(
        qmix_forward(q_small, s_small, params,
                     n_agents=N_AGENTS, hidden_dim=QMIX_HIDDEN))
    ref_small = qmix_reference(q_small, s_small, params,
                               n_agents=N_AGENTS, hidden_dim=QMIX_HIDDEN)
    assert out_small.shape == (2, 8, 1)
    assert jnp.allclose(out_small, ref_small, atol=1e-4, rtol=1e-4)

    # Larger case with a ragged tail: bs=3, episode_limit=100 -> N=300, tm=128
    # (3 grid steps after padding to 384 rows).
    q_big = jax.random.normal(k_q2, (3, 100, N_AGENTS), jnp.float32)
    s_big = jax.random.normal(k_s2, (3, 100, STATE_SHAPE), jnp.float32)
    ref_big = qmix_reference(q_big, s_big, params,
                             n_agents=N_AGENTS, hidden_dim=QMIX_HIDDEN)
    out_big = jax.block_until_ready(
        qmix_forward(q_big, s_big, params, n_agents=N_AGENTS,
                     hidden_dim=QMIX_HIDDEN, tm=128))
    assert out_big.shape == (3, 100, 1)
    assert jnp.allclose(out_big, ref_big, atol=1e-4, rtol=1e-4)

    # bf16-streamed variant (MXU-native on v6e/v7x), f32 accumulation in-kernel.
    out_bf16 = jax.block_until_ready(
        qmix_forward(q_big, s_big, params, n_agents=N_AGENTS,
                     hidden_dim=QMIX_HIDDEN, tm=128, compute_dtype=jnp.bfloat16))
    max_err = jnp.max(jnp.abs(out_bf16 - ref_big))
    assert max_err <= 0.05 * (jnp.max(jnp.abs(ref_big)) + 1.0)

    print("KERNEL_OK")
</pallas_src>

<mosaic_0001>
module attributes {stable_mosaic.version = 11 : i64} {
  func.func @qmix_kernel(%arg0: i32, %arg1: memref<16x4xf32, #tpu.memory_space<vmem>>, %arg2: memref<16x48xf32, #tpu.memory_space<vmem>>, %arg3: memref<48x896xf32, #tpu.memory_space<vmem>>, %arg4: memref<1x896xf32, #tpu.memory_space<vmem>>, %arg5: memref<1x128xf32, #tpu.memory_space<vmem>>, %arg6: memref<1x1xf32, #tpu.memory_space<smem>>, %arg7: memref<16x1xf32, #tpu.memory_space<vmem>>) attributes {dimension_semantics = [#tpu.dimension_semantics<parallel>], iteration_bounds = array<i64: 1>, scalar_prefetch = 0 : i64, scratch_operands = 0 : i64, tpu.core_type = #tpu.core_type<tc>, window_params = [{transform_indices = @transform_0, window_bounds = array<i64: 16, 4>}, {transform_indices = @transform_1, window_bounds = array<i64: 16, 48>}, {pipeline_mode = #tpu.pipeline_mode<synchronous>, transform_indices = @transform_2, window_bounds = array<i64: 48, 896>}, {pipeline_mode = #tpu.pipeline_mode<synchronous>, transform_indices = @transform_3, window_bounds = array<i64: 1, 896>}, {pipeline_mode = #tpu.pipeline_mode<synchronous>, transform_indices = @transform_4, window_bounds = array<i64: 1, 128>}, {transform_indices = @transform_5, window_bounds = array<i64: 1, 1>}, {transform_indices = @transform_6, window_bounds = array<i64: 16, 1>}]} {
    %c0 = arith.constant 0 : index
    %c0_0 = arith.constant 0 : index
    %0 = vector.load %arg1[%c0, %c0_0] : memref<16x4xf32, #tpu.memory_space<vmem>>, vector<16x4xf32>
    %c0_1 = arith.constant 0 : index
    %c0_2 = arith.constant 0 : index
    %1 = vector.load %arg2[%c0_1, %c0_2] : memref<16x48xf32, #tpu.memory_space<vmem>>, vector<16x48xf32>
    %c0_3 = arith.constant 0 : index
    %c0_4 = arith.constant 0 : index
    %2 = vector.load %arg3[%c0_3, %c0_4] : memref<48x896xf32, #tpu.memory_space<vmem>>, vector<48x896xf32>
    %cst = arith.constant dense<0.000000e+00> : vector<16x896xf32>
    %3 = tpu.matmul %1, %2, %cst {dimension_numbers = #tpu.dot_dimension_numbers<[1], [0], [0], [1], [0, 0, 1, 1], [], []>} : vector<16x48xf32>, vector<48x896xf32>, vector<16x896xf32> -> vector<16x896xf32>
    %c0_5 = arith.constant 0 : index
    %c0_6 = arith.constant 0 : index
    %4 = vector.load %arg4[%c0_5, %c0_6] : memref<1x896xf32, #tpu.memory_space<vmem>>, vector<1x896xf32>
    %5 = vector.broadcast %4 : vector<1x896xf32> to vector<16x896xf32>
    %6 = arith.addf %3, %5 : vector<16x896xf32>
    %7 = vector.extract_strided_slice %6 {offsets = [0, 512], sizes = [16, 128], strides = [1, 1]} : vector<16x896xf32> to vector<16x128xf32>
    %8 = vector.extract_strided_slice %6 {offsets = [0, 640], sizes = [16, 128], strides = [1, 1]} : vector<16x896xf32> to vector<16x128xf32>
    %9 = math.absf %8 : vector<16x128xf32>
    %10 = vector.extract_strided_slice %6 {offsets = [0, 768], sizes = [16, 128], strides = [1, 1]} : vector<16x896xf32> to vector<16x128xf32>
    %cst_7 = arith.constant 0.000000e+00 : f32
    %11 = vector.broadcast %cst_7 : f32 to vector<16x128xf32>
    %12 = arith.maximumf %10, %11 : vector<16x128xf32>
    %13 = vector.extract_strided_slice %0 {offsets = [0, 0], sizes = [16, 1], strides = [1, 1]} : vector<16x4xf32> to vector<16x1xf32>
    %14 = vector.extract_strided_slice %6 {offsets = [0, 0], sizes = [16, 128], strides = [1, 1]} : vector<16x896xf32> to vector<16x128xf32>
    %15 = math.absf %14 : vector<16x128xf32>
    %16 = vector.broadcast %13 : vector<16x1xf32> to vector<16x128xf32>
    %17 = arith.mulf %16, %15 : vector<16x128xf32>
    %18 = arith.addf %7, %17 : vector<16x128xf32>
    %19 = vector.extract_strided_slice %0 {offsets = [0, 1], sizes = [16, 1], strides = [1, 1]} : vector<16x4xf32> to vector<16x1xf32>
    %20 = vector.extract_strided_slice %6 {offsets = [0, 128], sizes = [16, 128], strides = [1, 1]} : vector<16x896xf32> to vector<16x128xf32>
    %21 = math.absf %20 : vector<16x128xf32>
    %22 = vector.broadcast %19 : vector<16x1xf32> to vector<16x128xf32>
    %23 = arith.mulf %22, %21 : vector<16x128xf32>
    %24 = arith.addf %18, %23 : vector<16x128xf32>
    %25 = vector.extract_strided_slice %0 {offsets = [0, 2], sizes = [16, 1], strides = [1, 1]} : vector<16x4xf32> to vector<16x1xf32>
    %26 = vector.extract_strided_slice %6 {offsets = [0, 256], sizes = [16, 128], strides = [1, 1]} : vector<16x896xf32> to vector<16x128xf32>
    %27 = math.absf %26 : vector<16x128xf32>
    %28 = vector.broadcast %25 : vector<16x1xf32> to vector<16x128xf32>
    %29 = arith.mulf %28, %27 : vector<16x128xf32>
    %30 = arith.addf %24, %29 : vector<16x128xf32>
    %31 = vector.extract_strided_slice %0 {offsets = [0, 3], sizes = [16, 1], strides = [1, 1]} : vector<16x4xf32> to vector<16x1xf32>
    %32 = vector.extract_strided_slice %6 {offsets = [0, 384], sizes = [16, 128], strides = [1, 1]} : vector<16x896xf32> to vector<16x128xf32>
    %33 = math.absf %32 : vector<16x128xf32>
    %34 = vector.broadcast %31 : vector<16x1xf32> to vector<16x128xf32>
    %35 = arith.mulf %34, %33 : vector<16x128xf32>
    %36 = arith.addf %30, %35 : vector<16x128xf32>
    %cst_8 = arith.constant 0.000000e+00 : f32
    %37 = vector.broadcast %cst_8 : f32 to vector<16x128xf32>
    %38 = arith.minimumf %36, %37 : vector<16x128xf32>
    %cst_9 = arith.constant 0.000000e+00 : f32
    %39 = vector.broadcast %cst_9 : f32 to vector<16x128xf32>
    %40 = arith.cmpf ogt, %36, %39 : vector<16x128xf32>
    %cst_10 = arith.constant 5.000000e-01 : f32
    %41 = vector.broadcast %cst_10 : f32 to vector<16x128xf32>
    %42 = arith.mulf %41, %38 : vector<16x128xf32>
    %43 = math.tanh %42 : vector<16x128xf32>
    %44 = math.exp %38 : vector<16x128xf32>
    %cst_11 = arith.constant 1.000000e+00 : f32
    %45 = vector.broadcast %cst_11 : f32 to vector<16x128xf32>
    %46 = arith.addf %44, %45 : vector<16x128xf32>
    %47 = arith.mulf %43, %46 : vector<16x128xf32>
    %48 = arith.select %40, %36, %47 : vector<16x128xi1>, vector<16x128xf32>
    %49 = arith.mulf %48, %9 : vector<16x128xf32>
    %c0_12 = arith.constant 0 : index
    %c0_13 = arith.constant 0 : index
    %50 = vector.load %arg5[%c0_12, %c0_13] : memref<1x128xf32, #tpu.memory_space<vmem>>, vector<1x128xf32>
    %51 = vector.broadcast %50 : vector<1x128xf32> to vector<16x128xf32>
    %52 = arith.mulf %12, %51 : vector<16x128xf32>
    %53 = arith.addf %49, %52 : vector<16x128xf32>
    %cst_14 = arith.constant dense<0.000000e+00> : vector<16xf32>
    %54 = vector.multi_reduction <add>, %53, %cst_14 [1] : vector<16x128xf32> to vector<16xf32>
    %55 = vector.shape_cast %54 : vector<16xf32> to vector<16x1xf32>
    %c0_15 = arith.constant 0 : index
    %c0_16 = arith.constant 0 : index
    %56 = memref.load %arg6[%c0_15, %c0_16] : memref<1x1xf32, #tpu.memory_space<smem>>
    %57 = vector.broadcast %56 : f32 to vector<16x1xf32>
    %58 = arith.addf %55, %57 : vector<16x1xf32>
    %c0_17 = arith.constant 0 : index
    %c0_18 = arith.constant 0 : index
    %59 = vector.load %arg7[%c0_17, %c0_18] : memref<16x1xf32, #tpu.memory_space<vmem>>, vector<16x1xf32>
    tpu.vector_store %arg7[%c0_17, %c0_18], %58 {strides = array<i32>} : memref<16x1xf32, #tpu.memory_space<vmem>>, vector<16x1xf32>,
    return
  }
  func.func @transform_0(%arg0: i32) -> (i32, i32) {
    %c0_i32 = arith.constant 0 : i32
    %c0_i32_0 = arith.constant 0 : i32
    return %arg0, %c0_i32 : i32, i32
  }
  func.func @transform_1(%arg0: i32) -> (i32, i32) {
    %c0_i32 = arith.constant 0 : i32
    %c0_i32_0 = arith.constant 0 : i32
    return %arg0, %c0_i32 : i32, i32
  }
  func.func @transform_2(%arg0: i32) -> (i32, i32) {
    %c0_i32 = arith.constant 0 : i32
    %c0_i32_0 = arith.constant 0 : i32
    %c0_i32_1 = arith.constant 0 : i32
    return %c0_i32, %c0_i32_0 : i32, i32
  }
  func.func @transform_3(%arg0: i32) -> (i32, i32) {
    %c0_i32 = arith.constant 0 : i32
    %c0_i32_0 = arith.constant 0 : i32
    %c0_i32_1 = arith.constant 0 : i32
    return %c0_i32, %c0_i32_0 : i32, i32
  }
  func.func @transform_4(%arg0: i32) -> (i32, i32) {
    %c0_i32 = arith.constant 0 : i32
    %c0_i32_0 = arith.constant 0 : i32
    %c0_i32_1 = arith.constant 0 : i32
    return %c0_i32, %c0_i32_0 : i32, i32
  }
  func.func @transform_5(%arg0: i32) -> (i32, i32) {
    %c0_i32 = arith.constant 0 : i32
    %c0_i32_0 = arith.constant 0 : i32
    %c0_i32_1 = arith.constant 0 : i32
    return %c0_i32, %c0_i32_0 : i32, i32
  }
  func.func @transform_6(%arg0: i32) -> (i32, i32) {
    %c0_i32 = arith.constant 0 : i32
    %c0_i32_0 = arith.constant 0 : i32
    return %arg0, %c0_i32 : i32, i32
  }
}

</mosaic_0001>

<llo_original>
// kernel: tpu_custom_call.1
$region0: #{tpu_custom_call.1}
  #allocation0 [shape = 'u32[]', space=smem, size = 0x4, offset = 0x4, fixed_abs, tag = 'smem constant byte address 0x4 - core index']
  #allocation1 [shape = 'u32[144,128]{1,0:T(1,128)}', space=vmem, size = 0x12000, scoped, tag = 'internal scratch']
  #allocation2 [shape = 'f32[1,1]{1,0:T(1,128)S(6)}', space=smem, size = 0x200, scoped, tag = 'scoped memory for tpu_custom_call.1']
  %s0 = inlined_call_operand.vmem [shape: f32[16,4], index: 0, kind: input, shape index: {}]
  %s1 = inlined_call_operand.vmem [shape: f32[16,48], index: 1, kind: input, shape index: {}]
  %s2 = inlined_call_operand.hbm [shape: f32[48,896], index: 2, kind: input, shape index: {}]
  %s3 = inlined_call_operand.vmem [shape: f32[1,896], index: 3, kind: input, shape index: {}]
  %s4 = inlined_call_operand.vmem [shape: f32[1,128], index: 4, kind: input, shape index: {}]
  %s5 = inlined_call_operand.<no memory space> [shape: f32[1,1], index: 5, kind: input, shape index: {}]
  %s6 = inlined_call_operand.vmem [shape: f32[16,1], index: 6, kind: output, shape index: {}]
  %s7 = sld [smem:[#allocation0]]
  $region38: #{tpu_custom_call.1} parent=0
    _
  %s9 = ssub.s32 1, %s7
  %s10 = scalar_select 0, %s9, %s7
  %11 = sst [smem:[#allocation2]] %s5
  $region1: #{tpu_custom_call.1} parent=0
    #allocation3 [shape = 'u8[172032]{0}', space=vmem, size = 0x2a000, scoped, tag = 'input window, operand 2, single buffered']
    #allocation4 [shape = 's32[1]{0}', space=sflag, size = 0x4, scoped, tag = 'scoped memory for tpu_custom_call.1']
    %12 = vsyncpa [#allocation4], 0
    // Predicated region
    $region2: #{tpu_custom_call.1} parent=1 // pred_check
      _
    $region3: #{tpu_custom_call.1} parent=1 // pred_check_branch
      %14 = sbr.rel (0) target = $region5
    $region4: #{tpu_custom_call.1} parent=1 // pred_region
      _
    $region5: #{tpu_custom_call.1} parent=1 // pred_fallthru
      _
    // Predicated region
    $region6: #{tpu_custom_call.1} parent=1 // pred_check
      _
    $region7: #{tpu_custom_call.1} parent=1 // pred_check_branch
      %16 = sbr.rel (0) target = $region9
    $region8: #{tpu_custom_call.1} parent=1 // pred_region
      _
    $region9: #{tpu_custom_call.1} parent=1 // pred_fallthru
      _
    // Predicated region
    $region10: #{tpu_custom_call.1} parent=1 // pred_check
      _
    $region11: #{tpu_custom_call.1} parent=1 // pred_check_branch
      %18 = sbr.rel (0) target = $region13
    $region12: #{tpu_custom_call.1} parent=1 // pred_region
      %s20 = ssub.s32 5376, 5376
      %21 = vsyncadd [#allocation4], %s20
      %s22 = sshll.u32 [#allocation3], 4
      %s23 = int_to_ptr.vmem [resolvable:$true] %s22
      %28 = dma.hbm_to_vmem [thread:$0]  %s2, 5376, %s23, [#allocation4], 896, 896, 56
    $region13: #{tpu_custom_call.1} parent=1 // pred_fallthru
      _
    // Predicated region
    $region14: #{tpu_custom_call.1} parent=1 // pred_check
      _
    $region15: #{tpu_custom_call.1} parent=1 // pred_check_branch
      %30 = sbr.rel (0) target = $region17
    $region16: #{tpu_custom_call.1} parent=1 // pred_region
      _
    $region17: #{tpu_custom_call.1} parent=1 // pred_fallthru
      _
    // Predicated region
    $region18: #{tpu_custom_call.1} parent=1 // pred_check
      _
    $region19: #{tpu_custom_call.1} parent=1 // pred_check_branch
      %32 = sbr.rel (0) target = $region21
    $region20: #{tpu_custom_call.1} parent=1 // pred_region
      _
    $region21: #{tpu_custom_call.1} parent=1 // pred_fallthru
      _
    // Predicated region
    $region22: #{tpu_custom_call.1} parent=1 // pred_check
      _
    $region23: #{tpu_custom_call.1} parent=1 // pred_check_branch
      %34 = sbr.rel (0) target = $region25
    $region24: #{tpu_custom_call.1} parent=1 // pred_region
      _
    $region25: #{tpu_custom_call.1} parent=1 // pred_fallthru
      _
    // Predicated region
    $region26: #{tpu_custom_call.1} parent=1 // pred_check
      _
    $region27: #{tpu_custom_call.1} parent=1 // pred_check_branch
      %36 = sbr.rel (0) target = $region29
    $region28: #{tpu_custom_call.1} parent=1 // pred_region
      %37 = dma.done [#allocation4], 5376
    $region29: #{tpu_custom_call.1} parent=1 // pred_fallthru
      _
    %v38 = vld [vmem:[%s0] sm:$0xff]
    %v39 = vld [vmem:[%s0 + $0x8] sm:$0xff]
    %v40 = vld [vmem:[%s1] sm:$0xff]
    %v41 = vld [vmem:[%s1 + $0x8] sm:$0xff]
    %v42 = vld [vmem:[#allocation3] sm:$0xff]
    %v43 = vld [vmem:[#allocation3 + $0x8] sm:$0xff]
    %v44 = vld [vmem:[#allocation3 + $0x10] sm:$0xff]
    %v45 = vld [vmem:[#allocation3 + $0x18] sm:$0xff]
    %v46 = vld [vmem:[#allocation3 + $0x20] sm:$0xff]
    %v47 = vld [vmem:[#allocation3 + $0x28] sm:$0xff]
    %v48 = vld [vmem:[#allocation3 + $0x30] sm:$0xff]
    %v49 = vld [vmem:[#allocation3 + $0x38] sm:$0xff]
    %v50 = vld [vmem:[#allocation3 + $0x40] sm:$0xff]
    %v51 = vld [vmem:[#allocation3 + $0x48] sm:$0xff]
    %v52 = vld [vmem:[#allocation3 + $0x50] sm:$0xff]
    %v53 = vld [vmem:[#allocation3 + $0x58] sm:$0xff]
    %v54 = vld [vmem:[#allocation3 + $0x60] sm:$0xff]
    %v55 = vld [vmem:[#allocation3 + $0x68] sm:$0xff]
    %v56 = vld [vmem:[#allocation3 + $0x70] sm:$0xff]
    %v57 = vld [vmem:[#allocation3 + $0x78] sm:$0xff]
    %v58 = vld [vmem:[#allocation3 + $0x80] sm:$0xff]
    %v59 = vld [vmem:[#allocation3 + $0x88] sm:$0xff]
    %v60 = vld [vmem:[#allocation3 + $0x90] sm:$0xff]
    %v61 = vld [vmem:[#allocation3 + $0x98] sm:$0xff]
    %v62 = vld [vmem:[#allocation3 + $0xa0] sm:$0xff]
    %v63 = vld [vmem:[#allocation3 + $0xa8] sm:$0xff]
    %v64 = vld [vmem:[#allocation3 + $0xb0] sm:$0xff]
    %v65 = vld [vmem:[#allocation3 + $0xb8] sm:$0xff]
    %v66 = vld [vmem:[#allocation3 + $0xc0] sm:$0xff]
    %v67 = vld [vmem:[#allocation3 + $0xc8] sm:$0xff]
    %v68 = vld [vmem:[#allocation3 + $0xd0] sm:$0xff]
    %v69 = vld [vmem:[#allocation3 + $0xd8] sm:$0xff]
    %v70 = vld [vmem:[#allocation3 + $0xe0] sm:$0xff]
    %v71 = vld [vmem:[#allocation3 + $0xe8] sm:$0xff]
    %v72 = vld [vmem:[#allocation3 + $0xf0] sm:$0xff]
    %v73 = vld [vmem:[#allocation3 + $0xf8] sm:$0xff]
    %v74 = vld [vmem:[#allocation3 + $0x100] sm:$0xff]
    %v75 = vld [vmem:[#allocation3 + $0x108] sm:$0xff]
    %v76 = vld [vmem:[#allocation3 + $0x110] sm:$0xff]
    %v77 = vld [vmem:[#allocation3 + $0x118] sm:$0xff]
    %v78 = vld [vmem:[#allocation3 + $0x120] sm:$0xff]
    %v79 = vld [vmem:[#allocation3 + $0x128] sm:$0xff]
    %v80 = vld [vmem:[#allocation3 + $0x130] sm:$0xff]
    %v81 = vld [vmem:[#allocation3 + $0x138] sm:$0xff]
    %v82 = vld [vmem:[#allocation3 + $0x140] sm:$0xff]
    %v83 = vld [vmem:[#allocation3 + $0x148] sm:$0xff]
    %v84 = vld [vmem:[%s3] sm:$0xff]
    %v86 = vlaneseq
    %v87 = vshrl.u32 %v86, 7
    %v88 = vsub.s32 0, %v87
    %v89 = vrot.slane %v84, %v88
    %v90 = vlaneseq
    %v91 = vshrl.u32 %v90, 7
    %v92 = vsub.s32 1, %v91
    %v93 = vrot.slane %v84, %v92
    %v94 = vlaneseq
    %v95 = vshrl.u32 %v94, 7
    %v96 = vsub.s32 2, %v95
    %v97 = vrot.slane %v84, %v96
    %v98 = vlaneseq
    %v99 = vshrl.u32 %v98, 7
    %v100 = vsub.s32 3, %v99
    %v101 = vrot.slane %v84, %v100
    %v102 = vlaneseq
    %v103 = vshrl.u32 %v102, 7
    %v104 = vsub.s32 4, %v103
    %v105 = vrot.slane %v84, %v104
    %v106 = vlaneseq
    %v107 = vshrl.u32 %v106, 7
    %v108 = vsub.s32 5, %v107
    %v109 = vrot.slane %v84, %v108
    %v110 = vlaneseq
    %v111 = vshrl.u32 %v110, 7
    %v112 = vsub.s32 6, %v111
    %v113 = vrot.slane %v84, %v112
    %vm121 = vcmask 392192
    %v123 = vsel %vm121, %v40, 0
    %v126 = vsel %vm121, %v41, 0
    %128 = vmatprep.subr.mxu0 0.0
    %129 = vmatpush1.msra.mxu0 0.0
    %130 = vmatprep.subr.mxu0 0.0
    %131 = vmatpush1.msra.mxu0 0.0
    %132 = vmatprep.subr.mxu0 0.0
    %133 = vmatpush1.msra.mxu0 0.0
    %134 = vmatprep.subr.mxu0 0.0
    %135 = vmatpush1.msra.mxu0 0.0
    %136 = vmatprep.subr.mxu0 0.0
    %137 = vmatpush1.msra.mxu0 0.0
    %138 = vmatprep.subr.mxu0 0.0
    %139 = vmatpush1.msra.mxu0 0.0
    %140 = vmatprep.subr.mxu0 0.0
    %141 = vmatpush1.msra.mxu0 0.0
    %142 = vmatprep.subr.mxu0 0.0
    %143 = vmatpush1.msra.mxu0 0.0
    %144 = vmatprep.subr.mxu0 0.0
    %145 = vmatpush1.msra.mxu0 0.0
    %146 = vmatprep.subr.mxu0 0.0
    %147 = vmatpush1.msra.mxu0 0.0
    %148 = vmatprep.subr.mxu0 %v78
    %149 = vmatpush1.msra.mxu0 %v77
    %150 = vmatprep.subr.mxu0 %v71
    %151 = vmatpush1.msra.mxu0 %v70
    %152 = vmatprep.subr.mxu0 %v64
    %153 = vmatpush1.msra.mxu0 %v63
    %154 = vmatprep.subr.mxu0 %v57
    %155 = vmatpush1.msra.mxu0 %v56
    %156 = vmatprep.subr.mxu0 %v50
    %157 = vmatpush1.msra.mxu0 %v49
    %158 = vmatprep.subr.mxu0 %v43
    %159 = vmatpush1.msra.mxu0 %v42
    %160 = vmatprep.subr.mxu0 0.0
    %161 = vmatpush2.msra.mxu0 0.0
    %162 = vmatprep.subr.mxu0 0.0
    %163 = vmatpush2.msra.mxu0 0.0
    %164 = vmatprep.subr.mxu0 0.0
    %165 = vmatpush2.msra.mxu0 0.0
    %166 = vmatprep.subr.mxu0 0.0
    %167 = vmatpush2.msra.mxu0 0.0
    %168 = vmatprep.subr.mxu0 0.0
    %169 = vmatpush2.msra.mxu0 0.0
    %170 = vmatprep.subr.mxu0 0.0
    %171 = vmatpush2.msra.mxu0 0.0
    %172 = vmatprep.subr.mxu0 0.0
    %173 = vmatpush2.msra.mxu0 0.0
    %174 = vmatprep.subr.mxu0 0.0
    %175 = vmatpush2.msra.mxu0 0.0
    %176 = vmatprep.subr.mxu0 0.0
    %177 = vmatpush2.msra.mxu0 0.0
    %178 = vmatprep.subr.mxu0 0.0
    %179 = vmatpush2.msra.mxu0 0.0
    %180 = vmatprep.subr.mxu0 0.0
    %181 = vmatpush2.msra.mxu0 0.0
    %182 = vmatprep.subr.mxu0 0.0
    %183 = vmatpush2.msra.mxu0 0.0
    %184 = vmatprep.subr.mxu0 0.0
    %185 = vmatpush2.msra.mxu0 0.0
    %186 = vmatprep.subr.mxu0 0.0
    %187 = vmatpush2.msra.mxu0 0.0
    %188 = vmatprep.subr.mxu0 0.0
    %189 = vmatpush2.msra.mxu0 0.0
    %190 = vmatprep.subr.mxu0 0.0
    %191 = vmatpush2.msra.mxu0 0.0
    %192 = vmatprep.mubr.f32.mxu0 0.0
    %193 = vmatmul.mubr.f32.gmra.mxu0 %v123
    %v194 = vpop.f32.mrf.mxu0
    %v195 = vadd.f32 %v89, %v194
    %v196 = vpop.f32.mrf.mxu0
    %v197 = vadd.f32 %v93, %v196
    %198 = vmatprep.mubr.f32.mxu0 0.0
    %199 = vmatmul.mubr.f32.gmra.mxu0 %v126
    %v200 = vpop.f32.mrf.mxu0
    %v201 = vadd.f32 %v89, %v200
    %v202 = vpop.f32.mrf.mxu0
    %v203 = vadd.f32 %v93, %v202
    %204 = vdwg.mxu0
    %205 = vmatprep.subr.mxu0 0.0
    %206 = vmatpush1.msra.mxu0 0.0
    %207 = vmatprep.subr.mxu0 0.0
    %208 = vmatpush1.msra.mxu0 0.0
    %209 = vmatprep.subr.mxu0 0.0
    %210 = vmatpush1.msra.mxu0 0.0
    %211 = vmatprep.subr.mxu0 0.0
    %212 = vmatpush1.msra.mxu0 0.0
    %213 = vmatprep.subr.mxu0 0.0
    %214 = vmatpush1.msra.mxu0 0.0
    %215 = vmatprep.subr.mxu0 0.0
    %216 = vmatpush1.msra.mxu0 0.0
    %217 = vmatprep.subr.mxu0 0.0
    %218 = vmatpush1.msra.mxu0 0.0
    %219 = vmatprep.subr.mxu0 0.0
    %220 = vmatpush1.msra.mxu0 0.0
    %221 = vmatprep.subr.mxu0 0.0
    %222 = vmatpush1.msra.mxu0 0.0
    %223 = vmatprep.subr.mxu0 0.0
    %224 = vmatpush1.msra.mxu0 0.0
    %225 = vmatprep.subr.mxu0 %v80
    %226 = vmatpush1.msra.mxu0 %v79
    %227 = vmatprep.subr.mxu0 %v73
    %228 = vmatpush1.msra.mxu0 %v72
    %229 = vmatprep.subr.mxu0 %v66
    %230 = vmatpush1.msra.mxu0 %v65
    %231 = vmatprep.subr.mxu0 %v59
    %232 = vmatpush1.msra.mxu0 %v58
    %233 = vmatprep.subr.mxu0 %v52
    %234 = vmatpush1.msra.mxu0 %v51
    %235 = vmatprep.subr.mxu0 %v45
    %236 = vmatpush1.msra.mxu0 %v44
    %237 = vmatprep.subr.mxu0 0.0
    %238 = vmatpush2.msra.mxu0 0.0
    %239 = vmatprep.subr.mxu0 0.0
    %240 = vmatpush2.msra.mxu0 0.0
    %241 = vmatprep.subr.mxu0 0.0
    %242 = vmatpush2.msra.mxu0 0.0
    %243 = vmatprep.subr.mxu0 0.0
    %244 = vmatpush2.msra.mxu0 0.0
    %245 = vmatprep.subr.mxu0 0.0
    %246 = vmatpush2.msra.mxu0 0.0
    %247 = vmatprep.subr.mxu0 0.0
    %248 = vmatpush2.msra.mxu0 0.0
    %249 = vmatprep.subr.mxu0 0.0
    %250 = vmatpush2.msra.mxu0 0.0
    %251 = vmatprep.subr.mxu0 0.0
    %252 = vmatpush2.msra.mxu0 0.0
    %253 = vmatprep.subr.mxu0 0.0
    %254 = vmatpush2.msra.mxu0 0.0
    %255 = vmatprep.subr.mxu0 0.0
    %256 = vmatpush2.msra.mxu0 0.0
    %257 = vmatprep.subr.mxu0 0.0
    %258 = vmatpush2.msra.mxu0 0.0
    %259 = vmatprep.subr.mxu0 0.0
    %260 = vmatpush2.msra.mxu0 0.0
    %261 = vmatprep.subr.mxu0 0.0
    %262 = vmatpush2.msra.mxu0 0.0
    %263 = vmatprep.subr.mxu0 0.0
    %264 = vmatpush2.msra.mxu0 0.0
    %265 = vmatprep.subr.mxu0 0.0
    %266 = vmatpush2.msra.mxu0 0.0
    %267 = vmatprep.subr.mxu0 0.0
    %268 = vmatpush2.msra.mxu0 0.0
    %269 = vmatprep.mubr.f32.mxu0 0.0
    %270 = vmatmul.mubr.f32.gmra.mxu0 %v123
    %v271 = vpop.f32.mrf.mxu0
    %v272 = vadd.f32 %v97, %v271
    %v273 = vpop.f32.mrf.mxu0
    %v274 = vadd.f32 %v101, %v273
    %275 = vmatprep.mubr.f32.mxu0 0.0
    %276 = vmatmul.mubr.f32.gmra.mxu0 %v126
    %v277 = vpop.f32.mrf.mxu0
    %v278 = vadd.f32 %v97, %v277
    %v279 = vpop.f32.mrf.mxu0
    %v280 = vadd.f32 %v101, %v279
    %281 = vdwg.mxu0
    %282 = vmatprep.subr.mxu0 0.0
    %283 = vmatpush1.msra.mxu0 0.0
    %284 = vmatprep.subr.mxu0 0.0
    %285 = vmatpush1.msra.mxu0 0.0
    %286 = vmatprep.subr.mxu0 0.0
    %287 = vmatpush1.msra.mxu0 0.0
    %288 = vmatprep.subr.mxu0 0.0
    %289 = vmatpush1.msra.mxu0 0.0
    %290 = vmatprep.subr.mxu0 0.0
    %291 = vmatpush1.msra.mxu0 0.0
    %292 = vmatprep.subr.mxu0 0.0
    %293 = vmatpush1.msra.mxu0 0.0
    %294 = vmatprep.subr.mxu0 0.0
    %295 = vmatpush1.msra.mxu0 0.0
    %296 = vmatprep.subr.mxu0 0.0
    %297 = vmatpush1.msra.mxu0 0.0
    %298 = vmatprep.subr.mxu0 0.0
    %299 = vmatpush1.msra.mxu0 0.0
    %300 = vmatprep.subr.mxu0 0.0
    %301 = vmatpush1.msra.mxu0 0.0
    %302 = vmatprep.subr.mxu0 %v82
    %303 = vmatpush1.msra.mxu0 %v81
    %304 = vmatprep.subr.mxu0 %v75
    %305 = vmatpush1.msra.mxu0 %v74
    %306 = vmatprep.subr.mxu0 %v68
    %307 = vmatpush1.msra.mxu0 %v67
    %308 = vmatprep.subr.mxu0 %v61
    %309 = vmatpush1.msra.mxu0 %v60
    %310 = vmatprep.subr.mxu0 %v54
    %311 = vmatpush1.msra.mxu0 %v53
    %312 = vmatprep.subr.mxu0 %v47
    %313 = vmatpush1.msra.mxu0 %v46
    %314 = vmatprep.subr.mxu0 0.0
    %315 = vmatpush2.msra.mxu0 0.0
    %316 = vmatprep.subr.mxu0 0.0
    %317 = vmatpush2.msra.mxu0 0.0
    %318 = vmatprep.subr.mxu0 0.0
    %319 = vmatpush2.msra.mxu0 0.0
    %320 = vmatprep.subr.mxu0 0.0
    %321 = vmatpush2.msra.mxu0 0.0
    %322 = vmatprep.subr.mxu0 0.0
    %323 = vmatpush2.msra.mxu0 0.0
    %324 = vmatprep.subr.mxu0 0.0
    %325 = vmatpush2.msra.mxu0 0.0
    %326 = vmatprep.subr.mxu0 0.0
    %327 = vmatpush2.msra.mxu0 0.0
    %328 = vmatprep.subr.mxu0 0.0
    %329 = vmatpush2.msra.mxu0 0.0
    %330 = vmatprep.subr.mxu0 0.0
    %331 = vmatpush2.msra.mxu0 0.0
    %332 = vmatprep.subr.mxu0 0.0
    %333 = vmatpush2.msra.mxu0 0.0
    %334 = vmatprep.subr.mxu0 0.0
    %335 = vmatpush2.msra.mxu0 0.0
    %336 = vmatprep.subr.mxu0 0.0
    %337 = vmatpush2.msra.mxu0 0.0
    %338 = vmatprep.subr.mxu0 0.0
    %339 = vmatpush2.msra.mxu0 0.0
    %340 = vmatprep.subr.mxu0 0.0
    %341 = vmatpush2.msra.mxu0 0.0
    %342 = vmatprep.subr.mxu0 0.0
    %343 = vmatpush2.msra.mxu0 0.0
    %344 = vmatprep.subr.mxu0 0.0
    %345 = vmatpush2.msra.mxu0 0.0
    %346 = vmatprep.mubr.f32.mxu0 0.0
    %347 = vmatmul.mubr.f32.gmra.mxu0 %v123
    %v348 = vpop.f32.mrf.mxu0
    %v349 = vadd.f32 %v105, %v348
    %v350 = vpop.f32.mrf.mxu0
    %v351 = vadd.f32 %v109, %v350
    %352 = vmatprep.mubr.f32.mxu0 0.0
    %353 = vmatmul.mubr.f32.gmra.mxu0 %v126
    %v354 = vpop.f32.mrf.mxu0
    %v355 = vadd.f32 %v105, %v354
    %v356 = vpop.f32.mrf.mxu0
    %v357 = vadd.f32 %v109, %v356
    %358 = vdwg.mxu0
    %359 = vmatprep.subr.mxu0 0.0
    %360 = vmatpush1.msra.mxu0 0.0
    %361 = vmatprep.subr.mxu0 0.0
    %362 = vmatpush1.msra.mxu0 0.0
    %363 = vmatprep.subr.mxu0 0.0
    %364 = vmatpush1.msra.mxu0 0.0
    %365 = vmatprep.subr.mxu0 0.0
    %366 = vmatpush1.msra.mxu0 0.0
    %367 = vmatprep.subr.mxu0 0.0
    %368 = vmatpush1.msra.mxu0 0.0
    %369 = vmatprep.subr.mxu0 0.0
    %370 = vmatpush1.msra.mxu0 0.0
    %371 = vmatprep.subr.mxu0 0.0
    %372 = vmatpush1.msra.mxu0 0.0
    %373 = vmatprep.subr.mxu0 0.0
    %374 = vmatpush1.msra.mxu0 0.0
    %375 = vmatprep.subr.mxu0 0.0
    %376 = vmatpush1.msra.mxu0 0.0
    %377 = vmatprep.subr.mxu0 0.0
    %378 = vmatpush1.msra.mxu0 0.0
    %379 = vmatprep.subr.mxu0 0.0
    %380 = vmatpush1.msra.mxu0 %v83
    %381 = vmatprep.subr.mxu0 0.0
    %382 = vmatpush1.msra.mxu0 %v76
    %383 = vmatprep.subr.mxu0 0.0
    %384 = vmatpush1.msra.mxu0 %v69
    %385 = vmatprep.subr.mxu0 0.0
    %386 = vmatpush1.msra.mxu0 %v62
    %387 = vmatprep.subr.mxu0 0.0
    %388 = vmatpush1.msra.mxu0 %v55
    %389 = vmatprep.subr.mxu0 0.0
    %390 = vmatpush1.msra.mxu0 %v48
    %391 = vmatprep.subr.mxu0 0.0
    %392 = vmatpush2.msra.mxu0 0.0
    %393 = vmatprep.subr.mxu0 0.0
    %394 = vmatpush2.msra.mxu0 0.0
    %395 = vmatprep.subr.mxu0 0.0
    %396 = vmatpush2.msra.mxu0 0.0
    %397 = vmatprep.subr.mxu0 0.0
    %398 = vmatpush2.msra.mxu0 0.0
    %399 = vmatprep.subr.mxu0 0.0
    %400 = vmatpush2.msra.mxu0 0.0
    %401 = vmatprep.subr.mxu0 0.0
    %402 = vmatpush2.msra.mxu0 0.0
    %403 = vmatprep.subr.mxu0 0.0
    %404 = vmatpush2.msra.mxu0 0.0
    %405 = vmatprep.subr.mxu0 0.0
    %406 = vmatpush2.msra.mxu0 0.0
    %407 = vmatprep.subr.mxu0 0.0
    %408 = vmatpush2.msra.mxu0 0.0
    %409 = vmatprep.subr.mxu0 0.0
    %410 = vmatpush2.msra.mxu0 0.0
    %411 = vmatprep.subr.mxu0 0.0
    %412 = vmatpush2.msra.mxu0 0.0
    %413 = vmatprep.subr.mxu0 0.0
    %414 = vmatpush2.msra.mxu0 0.0
    %415 = vmatprep.subr.mxu0 0.0
    %416 = vmatpush2.msra.mxu0 0.0
    %417 = vmatprep.subr.mxu0 0.0
    %418 = vmatpush2.msra.mxu0 0.0
    %419 = vmatprep.subr.mxu0 0.0
    %420 = vmatpush2.msra.mxu0 0.0
    %421 = vmatprep.subr.mxu0 0.0
    %422 = vmatpush2.msra.mxu0 0.0
    %423 = vmatprep.mubr.f32.mxu0 0.0
    %424 = vmatmul.mubr.f32.gmra.mxu0 %v123
    %v425 = vpop.f32.mrf.mxu0
    %v426 = vadd.f32 %v113, %v425
    %v427 = vpop.f32.mrf.mxu0
    %428 = vmatprep.mubr.f32.mxu0 0.0
    %429 = vmatmul.mubr.f32.gmra.mxu0 %v126
    %v430 = vpop.f32.mrf.mxu0
    %v431 = vadd.f32 %v113, %v430
    %v432 = vpop.f32.mrf.mxu0
    %433 = vdwg.mxu0
    %v434 = vand.u32 2147483647, %v351
    %v435 = vand.u32 2147483647, %v357
    %v436 = vmax.f32 %v426, 0.0
    %v437 = vmax.f32 %v431, 0.0
    %v438 = vand.u32 2147483647, %v195
    %v439 = vand.u32 2147483647, %v201
    %441 = vset.pattern.permute.xlu0 0
    %442 = vperm.xlu0 %441, %v38
    %v443 = vpop.permute.xlu0 %442
    %446 = vset.pattern.permute.xlu0 0
    %447 = vperm.xlu0 %446, %v39
    %v448 = vpop.permute.xlu0 %447
    %v450 = vmul.f32 %v443, %v438
    %v451 = vmul.f32 %v448, %v439
    %v452 = vadd.f32 %v349, %v450
    %v453 = vadd.f32 %v355, %v451
    %v454 = vand.u32 2147483647, %v197
    %v455 = vand.u32 2147483647, %v203
    %456 = vset.pattern.permute.xlu0 1
    %457 = vperm.xlu0 %456, %v38
    %v458 = vpop.permute.xlu0 %457
    %460 = vset.pattern.permute.xlu0 1
    %461 = vperm.xlu0 %460, %v39
    %v462 = vpop.permute.xlu0 %461
    %v464 = vmul.f32 %v458, %v454
    %v465 = vmul.f32 %v462, %v455
    %v466 = vadd.f32 %v452, %v464
    %v467 = vadd.f32 %v453, %v465
    %v468 = vand.u32 2147483647, %v272
    %v469 = vand.u32 2147483647, %v278
    %470 = vset.pattern.permute.xlu0 2
    %471 = vperm.xlu0 %470, %v38
    %v472 = vpop.permute.xlu0 %471
    %474 = vset.pattern.permute.xlu0 2
    %475 = vperm.xlu0 %474, %v39
    %v476 = vpop.permute.xlu0 %475
    %v478 = vmul.f32 %v472, %v468
    %v479 = vmul.f32 %v476, %v469
    %v480 = vadd.f32 %v466, %v478
    %v481 = vadd.f32 %v467, %v479
    %v482 = vand.u32 2147483647, %v274
    %v483 = vand.u32 2147483647, %v280
    %484 = vset.pattern.permute.xlu0 3
    %485 = vperm.xlu0 %484, %v38
    %v486 = vpop.permute.xlu0 %485
    %488 = vset.pattern.permute.xlu0 3
    %489 = vperm.xlu0 %488, %v39
    %v490 = vpop.permute.xlu0 %489
    %v492 = vmul.f32 %v486, %v482
    %v493 = vmul.f32 %v490, %v483
    %v494 = vadd.f32 %v480, %v492
    %v495 = vadd.f32 %v481, %v493
    %v496 = vmin.f32 %v494, 0.0
    %v497 = vmin.f32 %v495, 0.0
    %vm498 = vcmp.gt.f32.partialorder %v494, 0.0
    %vm499 = vcmp.gt.f32.partialorder %v495, 0.0
    %v500 = vmul.f32 %v496, 0.5
    %v501 = vmul.f32 %v497, 0.5
    %v502 = vtanh.pop %v500
    %v503 = vtanh.pop %v501
    %v504 = vmul.f32 %v496, 1.442695
    %v505 = vpow.pop %v504
    %v506 = vmul.f32 %v497, 1.442695
    %v507 = vpow.pop %v506
    %v508 = vadd.f32 %v505, 1.0
    %v509 = vadd.f32 %v507, 1.0
    %v510 = vmul.f32 %v502, %v508
    %v511 = vmul.f32 %v503, %v509
    %v512 = vsel %vm498, %v494, %v510
    %v513 = vsel %vm499, %v495, %v511
    %v514 = vmul.f32 %v512, %v434
    %v515 = vmul.f32 %v513, %v435
    %v516 = vld [vmem:[%s4] sm:$0x1]
    %v518 = vlaneseq
    %v519 = vshrl.u32 %v518, 7
    %v520 = vsub.s32 0, %v519
    %v521 = vrot.slane %v516, %v520
    %v523 = vmul.f32 %v436, %v521
    %v524 = vmul.f32 %v437, %v521
    %v525 = vadd.f32 %v514, %v523
    %v526 = vadd.f32 %v515, %v524
    %527 = vadd.xlane.f32.xlu0 %v525
    %v528 = vpop.xlane.xlu0 %527
    %529 = vadd.xlane.f32.xlu0 %v526
    %v530 = vpop.xlane.xlu0 %529
    %s531 = sld [smem:[#allocation2]]
    %v532 = vstv %s531
    %v533 = vadd.f32 %v528, %v532
    %v534 = vadd.f32 %v530, %v532
    %vm535 = vcmask 7168
    %536 = vst.msk [vmem:[%s6] sm:$0xff] %vm535, %v533
    %537 = vst.msk [vmem:[%s6 + $0x8] sm:$0xff] %vm535, %v534
    // Predicated region
    $region30: #{tpu_custom_call.1} parent=1 // pred_check
      _
    $region31: #{tpu_custom_call.1} parent=1 // pred_check_branch
      %539 = sbr.rel (0) target = $region33
    $region32: #{tpu_custom_call.1} parent=1 // pred_region
      _
    $region33: #{tpu_custom_call.1} parent=1 // pred_fallthru
      _
    // Predicated region
    $region34: #{tpu_custom_call.1} parent=1 // pred_check
      _
    $region35: #{tpu_custom_call.1} parent=1 // pred_check_branch
      %541 = sbr.rel (0) target = $region37
    $region36: #{tpu_custom_call.1} parent=1 // pred_region
      _
    $region37: #{tpu_custom_call.1} parent=1 // pred_fallthru
      _
    %542 = vsyncpa [#allocation4], 1

</llo_original>
